<compile_context>
chip_gen: v7x
topology: tpu7x:2x2x1
jax: 0.10.0
libtpu: 0.0.40
codegen_flags: <defaults>
</compile_context>

<pallas_src>
import jax
import jax.numpy as jnp
from jax.experimental import pallas as pl
from jax.experimental.pallas import tpu as pltpu

HIDDEN = 16
SUB = 8                 # sublane group: input features padded 4 -> 8, Q rows padded 2 -> 8
LAYER_ROW_STRIDE = 16   # row stride per layer inside the packed weight/bias slabs
NUM_LAYERS = 4
# Per-layer (out_rows, in_cols) slices of the packed slab, feature-padded.
_PAD_DIMS = ((HIDDEN, SUB), (HIDDEN, HIDDEN), (HIDDEN, HIDDEN), (SUB, HIDDEN))


def make_qnetwork_kernel(block_b, chunk_b):
    """Fused 4-layer MLP over a lane-dense (features, batch) tile."""
    n_chunks = block_b // chunk_b

    def kernel(x_ref, w_ref, b_ref, o_ref):
        # x_ref: (8, block_b)  bf16  -- features on sublanes, batch on lanes
        # w_ref: (64, 16)      bf16  -- packed weights, layer l at rows [16l, 16l+out_l)
        # b_ref: (64, 1)       f32   -- packed biases (column vectors, broadcast on lanes)
        # o_ref: (8, block_b)  f32   -- rows [0:action_size) hold the Q-values
        # Hoist the tiny weight/bias loads out of the chunk loop (VMEM-resident slab
        # -> a handful of vregs, reused by every chunk and every grid step).
        w = [w_ref[l * LAYER_ROW_STRIDE: l * LAYER_ROW_STRIDE + of, 0:inf]
             for l, (of, inf) in enumerate(_PAD_DIMS)]
        b = [b_ref[l * LAYER_ROW_STRIDE: l * LAYER_ROW_STRIDE + of, :]
             for l, (of, _) in enumerate(_PAD_DIMS)]

        # Static (trace-time unrolled) chunk loop: each chunk's activations stay in
        # vregs; slices are tile-aligned (chunk_b is a multiple of 128, rows full).
        for c in range(n_chunks):
            c0 = c * chunk_b
            h = x_ref[:, c0:c0 + chunk_b]                       # bf16 (8, chunk_b)
            for l in range(NUM_LAYERS):
                acc = jnp.dot(w[l], h, preferred_element_type=jnp.float32) + b[l]
                if l < NUM_LAYERS - 1:
                    h = jnp.maximum(acc, 0.0).astype(jnp.bfloat16)  # bf16 MXU operand
                else:
                    h = acc                                         # keep Q-values f32
            o_ref[:, c0:c0 + chunk_b] = h                       # lane-dense full store

    return kernel


def pack_params(params):
    """Pack w1..w4 (out,in) / b1..b4 (out,) into one bf16 weight slab + one f32 bias slab."""
    w_slab = jnp.zeros((NUM_LAYERS * LAYER_ROW_STRIDE, HIDDEN), jnp.float32)
    b_slab = jnp.zeros((NUM_LAYERS * LAYER_ROW_STRIDE, 1), jnp.float32)
    for li in range(NUM_LAYERS):
        w = params[f"w{li + 1}"]                 # (out, in), PyTorch layout
        bias = params[f"b{li + 1}"]              # (out,)
        out_f, in_f = w.shape
        r0 = li * LAYER_ROW_STRIDE
        w_slab = w_slab.at[r0:r0 + out_f, :in_f].set(w)
        b_slab = b_slab.at[r0:r0 + out_f, 0].set(bias)
    return w_slab.astype(jnp.bfloat16), b_slab


def _choose_tiles(B, block_b=None, chunk_b=1024):
    """Pick (block_b, chunk_b): big DMA tile (amortize grid overhead, >=2 steps for
    v7x megacore when B > 128), small in-kernel compute chunk (vreg residency)."""
    lanes = pl.cdiv(max(B, 1), 128) * 128
    if block_b is None:
        if lanes <= 128:
            block_b = 128
        else:
            half = pl.cdiv(lanes, 2)                       # >= 2 grid steps
            block_b = min(16384, pl.cdiv(half, 128) * 128)  # cap: ~2 MiB double-buffered
    assert block_b % 128 == 0, "block_b must be a multiple of 128 lanes"
    chunk_b = min(chunk_b, block_b)
    while block_b % chunk_b != 0:                          # always terminates at 128
        chunk_b //= 2
    chunk_b = max(chunk_b, 128)
    assert block_b % chunk_b == 0
    return block_b, chunk_b


def qnetwork_forward_packed(x_fm, w_slab, b_slab, *, block_b, chunk_b):
    """Hot path: feature-major, pre-padded input (no wrapper-side HBM passes).

    x_fm: (8, B_pad) bf16, rows [0:state_size) are features, B_pad % block_b == 0.
    Returns (8, B_pad) f32; rows [0:action_size) are the Q-values.
    """
    sub, b_pad = x_fm.shape
    assert sub == SUB
    assert b_pad % block_b == 0 and block_b % chunk_b == 0 and chunk_b % 128 == 0

    flops = 2 * b_pad * sum(o * i for o, i in _PAD_DIMS)
    bytes_accessed = (b_pad * SUB * (2 + 4)                 # x (bf16) in + Q slab (f32) out
                      + w_slab.size * 2 + b_slab.size * 4)  # resident slabs (DMA'd once)

    return pl.pallas_call(
        make_qnetwork_kernel(block_b, chunk_b),
        out_shape=jax.ShapeDtypeStruct((SUB, b_pad), jnp.float32),
        grid=(b_pad // block_b,),
        in_specs=[
            pl.BlockSpec((SUB, block_b), lambda i: (0, i)),   # x tile: batch on lanes
            pl.BlockSpec(w_slab.shape, lambda i: (0, 0)),     # weight slab: VMEM-resident
            pl.BlockSpec(b_slab.shape, lambda i: (0, 0)),     # bias slab: VMEM-resident
        ],
        out_specs=pl.BlockSpec((SUB, block_b), lambda i: (0, i)),  # lane-dense output
        compiler_params=pltpu.CompilerParams(
            dimension_semantics=("parallel",),   # shard batch grid across v7x TCs
            vmem_limit_bytes=32 << 20),          # explicit budget; tiles stay ~2 MiB
        cost_estimate=pl.CostEstimate(
            flops=flops, transcendentals=0, bytes_accessed=bytes_accessed),
    )(x_fm, w_slab, b_slab)


def qnetwork_forward(x, params, *, block_b=None, chunk_b=1024):
    """PyTorch-semantics wrapper: x (B, state_size) f32 -> (B, action_size) f32.

    The pad/transpose here is a convenience; for best end-to-end throughput keep
    activations feature-major and call qnetwork_forward_packed directly.
    """
    B, S = x.shape
    A = params["w4"].shape[0]
    assert S <= SUB and A <= SUB

    block_b, chunk_b = _choose_tiles(B, block_b, chunk_b)
    b_pad = pl.cdiv(B, block_b) * block_b

    # Feature-major bf16 slab: features padded to 8 sublanes, batch padded to tile.
    x_fm = jnp.zeros((SUB, b_pad), jnp.bfloat16).at[:S, :B].set(x.T.astype(jnp.bfloat16))
    w_slab, b_slab = pack_params(params)

    out_fm = qnetwork_forward_packed(x_fm, w_slab, b_slab,
                                     block_b=block_b, chunk_b=chunk_b)
    return out_fm[:A, :B].T


def init_params(key, state_size, action_size, hidden=HIDDEN):
    """PyTorch nn.Linear default init: U[-1/sqrt(fan_in), +1/sqrt(fan_in)];
    weights stored in PyTorch layout (out_features, in_features)."""
    dims = [(hidden, state_size), (hidden, hidden), (hidden, hidden), (action_size, hidden)]
    params = {}
    for i, (fan_out, fan_in) in enumerate(dims, start=1):
        key, kw, kb = jax.random.split(key, 3)
        bound = 1.0 / float(fan_in) ** 0.5
        params[f"w{i}"] = jax.random.uniform(
            kw, (fan_out, fan_in), jnp.float32, minval=-bound, maxval=bound)
        params[f"b{i}"] = jax.random.uniform(
            kb, (fan_out,), jnp.float32, minval=-bound, maxval=bound)
    return params


def reference_forward(x, params):
    """Pure f32 reference (matches the PyTorch module numerically)."""
    h = jnp.maximum(x @ params["w1"].T + params["b1"], 0.0)
    h = jnp.maximum(h @ params["w2"].T + params["b2"], 0.0)
    h = jnp.maximum(h @ params["w3"].T + params["b3"], 0.0)
    return h @ params["w4"].T + params["b4"]


def reference_forward_bf16(x, params):
    """Reference with the same bf16-operand / f32-accumulate casts as the kernel."""
    h = x.astype(jnp.bfloat16)
    for li in range(1, NUM_LAYERS + 1):
        w = params[f"w{li}"].astype(jnp.bfloat16)
        h = jnp.dot(h, w.T, preferred_element_type=jnp.float32) + params[f"b{li}"]
        if li < NUM_LAYERS:
            h = jnp.maximum(h, 0.0).astype(jnp.bfloat16)
    return h


if __name__ == "__main__":
    state_size = 4    # CartPole-v0 observation dim
    action_size = 2   # CartPole-v0 action dim

    key = jax.random.PRNGKey(0)
    key, kx1, kx2 = jax.random.split(key, 3)
    params = init_params(key, state_size, action_size)

    # Case 1: typical DQN minibatch (single 128-lane tile, single chunk).
    x_small = jax.random.normal(kx1, (64, state_size), dtype=jnp.float32)
    out_small = jax.block_until_ready(qnetwork_forward(x_small, params))
    assert out_small.shape == (64, action_size)
    assert jnp.allclose(out_small, reference_forward_bf16(x_small, params),
                        atol=1e-3, rtol=1e-3), "mismatch vs bf16-matched ref (B=64)"
    assert jnp.allclose(out_small, reference_forward(x_small, params),
                        atol=5e-2, rtol=5e-2), "mismatch vs f32 ref (B=64)"

    # Case 2: larger batch with explicit tiles so both the multi-step batch grid
    # (>= 2 "parallel" steps -> v7x megacore) and the in-kernel chunk loop run.
    x_big = jax.random.normal(kx2, (512, state_size), dtype=jnp.float32)
    out_big = jax.block_until_ready(
        qnetwork_forward(x_big, params, block_b=256, chunk_b=128))
    assert out_big.shape == (512, action_size)
    assert jnp.allclose(out_big, reference_forward_bf16(x_big, params),
                        atol=1e-3, rtol=1e-3), "mismatch vs bf16-matched ref (B=512)"
    assert jnp.allclose(out_big, reference_forward(x_big, params),
                        atol=5e-2, rtol=5e-2), "mismatch vs f32 ref (B=512)"

    # TODO(synk): gym environment interaction, replay buffer and the optimizer step
    # are outside the forward pass and not translated here.
    print("KERNEL_OK")
</pallas_src>

<mosaic_0001>
module attributes {stable_mosaic.version = 11 : i64} {
  func.func @kernel(%arg0: i32, %arg1: memref<8x128xbf16, #tpu.memory_space<vmem>>, %arg2: memref<64x16xbf16, #tpu.memory_space<vmem>>, %arg3: memref<64x1xf32, #tpu.memory_space<vmem>>, %arg4: memref<8x128xf32, #tpu.memory_space<vmem>>) attributes {dimension_semantics = [#tpu.dimension_semantics<parallel>], iteration_bounds = array<i64: 1>, scalar_prefetch = 0 : i64, scratch_operands = 0 : i64, tpu.core_type = #tpu.core_type<tc>, window_params = [{transform_indices = @transform_0, window_bounds = array<i64: 8, 128>}, {pipeline_mode = #tpu.pipeline_mode<synchronous>, transform_indices = @transform_1, window_bounds = array<i64: 64, 16>}, {pipeline_mode = #tpu.pipeline_mode<synchronous>, transform_indices = @transform_2, window_bounds = array<i64: 64, 1>}, {transform_indices = @transform_3, window_bounds = array<i64: 8, 128>}]} {
    %c0 = arith.constant 0 : index
    %c0_0 = arith.constant 0 : index
    %0 = vector.load %arg2[%c0, %c0_0] : memref<64x16xbf16, #tpu.memory_space<vmem>>, vector<16x8xbf16>
    %c16 = arith.constant 16 : index
    %c0_1 = arith.constant 0 : index
    %1 = vector.load %arg2[%c16, %c0_1] : memref<64x16xbf16, #tpu.memory_space<vmem>>, vector<16x16xbf16>
    %c32 = arith.constant 32 : index
    %c0_2 = arith.constant 0 : index
    %2 = vector.load %arg2[%c32, %c0_2] : memref<64x16xbf16, #tpu.memory_space<vmem>>, vector<16x16xbf16>
    %c48 = arith.constant 48 : index
    %c0_3 = arith.constant 0 : index
    %3 = vector.load %arg2[%c48, %c0_3] : memref<64x16xbf16, #tpu.memory_space<vmem>>, vector<8x16xbf16>
    %c0_4 = arith.constant 0 : index
    %c0_5 = arith.constant 0 : index
    %4 = vector.load %arg3[%c0_4, %c0_5] : memref<64x1xf32, #tpu.memory_space<vmem>>, vector<16x1xf32>
    %c16_6 = arith.constant 16 : index
    %c0_7 = arith.constant 0 : index
    %5 = vector.load %arg3[%c16_6, %c0_7] : memref<64x1xf32, #tpu.memory_space<vmem>>, vector<16x1xf32>
    %c32_8 = arith.constant 32 : index
    %c0_9 = arith.constant 0 : index
    %6 = vector.load %arg3[%c32_8, %c0_9] : memref<64x1xf32, #tpu.memory_space<vmem>>, vector<16x1xf32>
    %c48_10 = arith.constant 48 : index
    %c0_11 = arith.constant 0 : index
    %7 = vector.load %arg3[%c48_10, %c0_11] : memref<64x1xf32, #tpu.memory_space<vmem>>, vector<8x1xf32>
    %c0_12 = arith.constant 0 : index
    %c0_13 = arith.constant 0 : index
    %8 = vector.load %arg1[%c0_12, %c0_13] : memref<8x128xbf16, #tpu.memory_space<vmem>>, vector<8x128xbf16>
    %cst = arith.constant dense<0.000000e+00> : vector<16x128xf32>
    %9 = tpu.matmul %0, %8, %cst {dimension_numbers = #tpu.dot_dimension_numbers<[1], [0], [0], [1], [0, 0, 1, 1], [], []>} : vector<16x8xbf16>, vector<8x128xbf16>, vector<16x128xf32> -> vector<16x128xf32>
    %10 = vector.broadcast %4 : vector<16x1xf32> to vector<16x128xf32>
    %11 = arith.addf %9, %10 : vector<16x128xf32>
    %cst_14 = arith.constant 0.000000e+00 : f32
    %12 = vector.broadcast %cst_14 : f32 to vector<16x128xf32>
    %13 = arith.maximumf %11, %12 : vector<16x128xf32>
    %14 = arith.truncf %13 : vector<16x128xf32> to vector<16x128xbf16>
    %cst_15 = arith.constant dense<0.000000e+00> : vector<16x128xf32>
    %15 = tpu.matmul %1, %14, %cst_15 {dimension_numbers = #tpu.dot_dimension_numbers<[1], [0], [0], [1], [0, 0, 1, 1], [], []>} : vector<16x16xbf16>, vector<16x128xbf16>, vector<16x128xf32> -> vector<16x128xf32>
    %16 = vector.broadcast %5 : vector<16x1xf32> to vector<16x128xf32>
    %17 = arith.addf %15, %16 : vector<16x128xf32>
    %cst_16 = arith.constant 0.000000e+00 : f32
    %18 = vector.broadcast %cst_16 : f32 to vector<16x128xf32>
    %19 = arith.maximumf %17, %18 : vector<16x128xf32>
    %20 = arith.truncf %19 : vector<16x128xf32> to vector<16x128xbf16>
    %cst_17 = arith.constant dense<0.000000e+00> : vector<16x128xf32>
    %21 = tpu.matmul %2, %20, %cst_17 {dimension_numbers = #tpu.dot_dimension_numbers<[1], [0], [0], [1], [0, 0, 1, 1], [], []>} : vector<16x16xbf16>, vector<16x128xbf16>, vector<16x128xf32> -> vector<16x128xf32>
    %22 = vector.broadcast %6 : vector<16x1xf32> to vector<16x128xf32>
    %23 = arith.addf %21, %22 : vector<16x128xf32>
    %cst_18 = arith.constant 0.000000e+00 : f32
    %24 = vector.broadcast %cst_18 : f32 to vector<16x128xf32>
    %25 = arith.maximumf %23, %24 : vector<16x128xf32>
    %26 = arith.truncf %25 : vector<16x128xf32> to vector<16x128xbf16>
    %cst_19 = arith.constant dense<0.000000e+00> : vector<8x128xf32>
    %27 = tpu.matmul %3, %26, %cst_19 {dimension_numbers = #tpu.dot_dimension_numbers<[1], [0], [0], [1], [0, 0, 1, 1], [], []>} : vector<8x16xbf16>, vector<16x128xbf16>, vector<8x128xf32> -> vector<8x128xf32>
    %28 = vector.broadcast %7 : vector<8x1xf32> to vector<8x128xf32>
    %29 = arith.addf %27, %28 : vector<8x128xf32>
    %c0_20 = arith.constant 0 : index
    %c0_21 = arith.constant 0 : index
    %30 = vector.load %arg4[%c0_20, %c0_21] : memref<8x128xf32, #tpu.memory_space<vmem>>, vector<8x128xf32>
    tpu.vector_store %arg4[%c0_20, %c0_21], %29 {strides = array<i32>} : memref<8x128xf32, #tpu.memory_space<vmem>>, vector<8x128xf32>,
    return
  }
  func.func @transform_0(%arg0: i32) -> (i32, i32) {
    %c0_i32 = arith.constant 0 : i32
    %c0_i32_0 = arith.constant 0 : i32
    return %c0_i32, %arg0 : i32, i32
  }
  func.func @transform_1(%arg0: i32) -> (i32, i32) {
    %c0_i32 = arith.constant 0 : i32
    %c0_i32_0 = arith.constant 0 : i32
    %c0_i32_1 = arith.constant 0 : i32
    return %c0_i32, %c0_i32_0 : i32, i32
  }
  func.func @transform_2(%arg0: i32) -> (i32, i32) {
    %c0_i32 = arith.constant 0 : i32
    %c0_i32_0 = arith.constant 0 : i32
    %c0_i32_1 = arith.constant 0 : i32
    return %c0_i32, %c0_i32_0 : i32, i32
  }
  func.func @transform_3(%arg0: i32) -> (i32, i32) {
    %c0_i32 = arith.constant 0 : i32
    %c0_i32_0 = arith.constant 0 : i32
    return %c0_i32, %arg0 : i32, i32
  }
}

</mosaic_0001>

<llo_original>
// kernel: tpu_custom_call.1
$region0: #{tpu_custom_call.1}
  #allocation0 [shape = 'u32[]', space=smem, size = 0x4, offset = 0x4, fixed_abs, tag = 'smem constant byte address 0x4 - core index']
  #allocation1 [shape = 'u32[144,128]{1,0:T(1,128)}', space=vmem, size = 0x12000, scoped, tag = 'internal scratch']
  %s0 = inlined_call_operand.vmem [shape: bf16[8,128], index: 0, kind: input, shape index: {}]
  %s1 = inlined_call_operand.vmem [shape: bf16[64,16], index: 1, kind: input, shape index: {}]
  %s2 = inlined_call_operand.vmem [shape: f32[64,1], index: 2, kind: input, shape index: {}]
  %s3 = inlined_call_operand.hbm [shape: f32[8,128], index: 3, kind: output, shape index: {}]
  %s4 = sld [smem:[#allocation0]]
  $region22: #{tpu_custom_call.1} parent=0
    _
  %s6 = ssub.s32 1, %s4
  %s7 = scalar_select 0, %s6, %s4
  $region1: #{tpu_custom_call.1} parent=0
    #allocation2 [shape = 'u8[4096]{0}', space=vmem, size = 0x1000, scoped, tag = 'output window, operand 0, single buffered']
    #allocation3 [shape = 's32[1]{0}', space=sflag, size = 0x4, scoped, tag = 'scoped memory for tpu_custom_call.1']
    %8 = vsyncpa [#allocation3], 0
    // Predicated region
    $region2: #{tpu_custom_call.1} parent=1 // pred_check
      _
    $region3: #{tpu_custom_call.1} parent=1 // pred_check_branch
      %10 = sbr.rel (0) target = $region5
    $region4: #{tpu_custom_call.1} parent=1 // pred_region
      _
    $region5: #{tpu_custom_call.1} parent=1 // pred_fallthru
      _
    // Predicated region
    $region6: #{tpu_custom_call.1} parent=1 // pred_check
      _
    $region7: #{tpu_custom_call.1} parent=1 // pred_check_branch
      %12 = sbr.rel (0) target = $region9
    $region8: #{tpu_custom_call.1} parent=1 // pred_region
      _
    $region9: #{tpu_custom_call.1} parent=1 // pred_fallthru
      _
    // Predicated region
    $region10: #{tpu_custom_call.1} parent=1 // pred_check
      _
    $region11: #{tpu_custom_call.1} parent=1 // pred_check_branch
      %14 = sbr.rel (0) target = $region13
    $region12: #{tpu_custom_call.1} parent=1 // pred_region
      _
    $region13: #{tpu_custom_call.1} parent=1 // pred_fallthru
      _
    %v16 = vld [vmem:[%s1] sm:$0xf]
    %v17 = vld [vmem:[%s1 + $0x4] sm:$0xf]
    %v18 = vld [vmem:[%s1 + $0x8] sm:$0xf]
    %v19 = vld [vmem:[%s1 + $0xc] sm:$0xf]
    %v20 = vld [vmem:[%s1 + $0x10] sm:$0xf]
    %v21 = vld [vmem:[%s1 + $0x14] sm:$0xf]
    %v22 = vld [vmem:[%s1 + $0x18] sm:$0xf]
    %v23 = vld [vmem:[%s2] sm:$0xff]
    %v24 = vld [vmem:[%s2 + $0x8] sm:$0xff]
    %v25 = vld [vmem:[%s2 + $0x10] sm:$0xff]
    %v26 = vld [vmem:[%s2 + $0x18] sm:$0xff]
    %v27 = vld [vmem:[%s2 + $0x20] sm:$0xff]
    %v28 = vld [vmem:[%s2 + $0x28] sm:$0xff]
    %v29 = vld [vmem:[%s2 + $0x30] sm:$0xff]
    %v30 = vld [vmem:[%s0] sm:$0xf]
    %32 = vset.pattern.permute.xlu0 0
    %33 = vperm.xlu0 %32, %v23
    %v34 = vpop.permute.xlu0 %33
    %37 = vset.pattern.permute.xlu0 0
    %38 = vperm.xlu0 %37, %v24
    %v39 = vpop.permute.xlu0 %38
    %v43 = vunpack.c.l.b16 %v16
    %v44 = vunpack.c.l.b16 %v17
    %v45 = vpack.c.b16 %v44, %v43
    %vm46 = vcmask 64512
    %v48 = vsel %vm46, %v45, 0
    %vm50 = vcmask 1043456
    %v52 = vsel %vm50, %v30, 0
    %54 = vmatprep.subr.bf16.mxu0 0
    %55 = vmatpush1.bf16.msra.mxu0 %v52
    %56 = vmatprep.subr.bf16.mxu0 0
    %57 = vmatpush1.bf16.msra.mxu0 0
    %58 = vmatprep.subr.bf16.mxu0 0
    %59 = vmatpush1.bf16.msra.mxu0 0
    %60 = vmatprep.subr.bf16.mxu0 0
    %61 = vmatpush1.bf16.msra.mxu0 0
    %62 = vmatprep.subr.bf16.mxu0 0
    %63 = vmatpush1.bf16.msra.mxu0 0
    %64 = vmatprep.subr.bf16.mxu0 0
    %65 = vmatpush1.bf16.msra.mxu0 0
    %66 = vmatprep.subr.bf16.mxu0 0
    %67 = vmatpush1.bf16.msra.mxu0 0
    %68 = vmatprep.subr.bf16.mxu0 0
    %69 = vmatpush1.bf16.msra.mxu0 0
    %70 = vmatprep.subr.bf16.mxu0 0
    %71 = vmatpush1.bf16.msra.mxu0 0
    %72 = vmatprep.subr.bf16.mxu0 0
    %73 = vmatpush1.bf16.msra.mxu0 0
    %74 = vmatprep.subr.bf16.mxu0 0
    %75 = vmatpush1.bf16.msra.mxu0 0
    %76 = vmatprep.subr.bf16.mxu0 0
    %77 = vmatpush1.bf16.msra.mxu0 0
    %78 = vmatprep.subr.bf16.mxu0 0
    %79 = vmatpush1.bf16.msra.mxu0 0
    %80 = vmatprep.subr.bf16.mxu0 0
    %81 = vmatpush1.bf16.msra.mxu0 0
    %82 = vmatprep.subr.bf16.mxu0 0
    %83 = vmatpush1.bf16.msra.mxu0 0
    %84 = vmatprep.subr.bf16.mxu0 0
    %85 = vmatpush1.bf16.msra.mxu0 0
    %86 = vmatprep.mubr.bf16.mxu0 0
    %87 = vmatmul.mubr.bf16.gmra.mrb[0].mxu0 %v48
    %v88 = vpop.f32.mrb[0].mxu0
    %v89 = vadd.f32 %v34, %v88
    %v90 = vpop.f32.mrb[0].mxu0
    %v91 = vpop.f32.mrb[0].mxu0
    %v92 = vadd.f32 %v39, %v91
    %v93 = vpop.f32.mrb[0].mxu0
    %94 = vdwg.mxu0
    %v95 = vmax.f32 %v89, 0.0
    %v96 = vmax.f32 %v92, 0.0
    %v97 = vpack.c.bf16 %v96, %v95
    %99 = vset.pattern.permute.xlu0 0
    %100 = vperm.xlu0 %99, %v25
    %v101 = vpop.permute.xlu0 %100
    %104 = vset.pattern.permute.xlu0 0
    %105 = vperm.xlu0 %104, %v26
    %v106 = vpop.permute.xlu0 %105
    %v110 = vunpack.c.l.b16 %v18
    %v111 = vunpack.c.l.b16 %v19
    %v112 = vpack.c.b16 %v111, %v110
    %vm113 = vcmask 130048
    %v115 = vsel %vm113, %v112, 0
    %117 = vmatprep.subr.bf16.mxu0 0
    %118 = vmatpush1.bf16.msra.mxu0 %v97
    %119 = vmatprep.subr.bf16.mxu0 0
    %120 = vmatpush1.bf16.msra.mxu0 0
    %121 = vmatprep.subr.bf16.mxu0 0
    %122 = vmatpush1.bf16.msra.mxu0 0
    %123 = vmatprep.subr.bf16.mxu0 0
    %124 = vmatpush1.bf16.msra.mxu0 0
    %125 = vmatprep.subr.bf16.mxu0 0
    %126 = vmatpush1.bf16.msra.mxu0 0
    %127 = vmatprep.subr.bf16.mxu0 0
    %128 = vmatpush1.bf16.msra.mxu0 0
    %129 = vmatprep.subr.bf16.mxu0 0
    %130 = vmatpush1.bf16.msra.mxu0 0
    %131 = vmatprep.subr.bf16.mxu0 0
    %132 = vmatpush1.bf16.msra.mxu0 0
    %133 = vmatprep.subr.bf16.mxu0 0
    %134 = vmatpush1.bf16.msra.mxu0 0
    %135 = vmatprep.subr.bf16.mxu0 0
    %136 = vmatpush1.bf16.msra.mxu0 0
    %137 = vmatprep.subr.bf16.mxu0 0
    %138 = vmatpush1.bf16.msra.mxu0 0
    %139 = vmatprep.subr.bf16.mxu0 0
    %140 = vmatpush1.bf16.msra.mxu0 0
    %141 = vmatprep.subr.bf16.mxu0 0
    %142 = vmatpush1.bf16.msra.mxu0 0
    %143 = vmatprep.subr.bf16.mxu0 0
    %144 = vmatpush1.bf16.msra.mxu0 0
    %145 = vmatprep.subr.bf16.mxu0 0
    %146 = vmatpush1.bf16.msra.mxu0 0
    %147 = vmatprep.subr.bf16.mxu0 0
    %148 = vmatpush1.bf16.msra.mxu0 0
    %149 = vmatprep.mubr.bf16.mxu0 0
    %150 = vmatmul.mubr.bf16.gmra.mrb[0].mxu0 %v115
    %v151 = vpop.f32.mrb[0].mxu0
    %v152 = vadd.f32 %v101, %v151
    %v153 = vpop.f32.mrb[0].mxu0
    %v154 = vpop.f32.mrb[0].mxu0
    %v155 = vadd.f32 %v106, %v154
    %v156 = vpop.f32.mrb[0].mxu0
    %157 = vdwg.mxu0
    %v158 = vmax.f32 %v152, 0.0
    %v159 = vmax.f32 %v155, 0.0
    %v160 = vpack.c.bf16 %v159, %v158
    %162 = vset.pattern.permute.xlu0 0
    %163 = vperm.xlu0 %162, %v27
    %v164 = vpop.permute.xlu0 %163
    %167 = vset.pattern.permute.xlu0 0
    %168 = vperm.xlu0 %167, %v28
    %v169 = vpop.permute.xlu0 %168
    %v173 = vunpack.c.l.b16 %v20
    %v174 = vunpack.c.l.b16 %v21
    %v175 = vpack.c.b16 %v174, %v173
    %v177 = vsel %vm113, %v175, 0
    %179 = vmatprep.subr.bf16.mxu0 0
    %180 = vmatpush1.bf16.msra.mxu0 %v160
    %181 = vmatprep.subr.bf16.mxu0 0
    %182 = vmatpush1.bf16.msra.mxu0 0
    %183 = vmatprep.subr.bf16.mxu0 0
    %184 = vmatpush1.bf16.msra.mxu0 0
    %185 = vmatprep.subr.bf16.mxu0 0
    %186 = vmatpush1.bf16.msra.mxu0 0
    %187 = vmatprep.subr.bf16.mxu0 0
    %188 = vmatpush1.bf16.msra.mxu0 0
    %189 = vmatprep.subr.bf16.mxu0 0
    %190 = vmatpush1.bf16.msra.mxu0 0
    %191 = vmatprep.subr.bf16.mxu0 0
    %192 = vmatpush1.bf16.msra.mxu0 0
    %193 = vmatprep.subr.bf16.mxu0 0
    %194 = vmatpush1.bf16.msra.mxu0 0
    %195 = vmatprep.subr.bf16.mxu0 0
    %196 = vmatpush1.bf16.msra.mxu0 0
    %197 = vmatprep.subr.bf16.mxu0 0
    %198 = vmatpush1.bf16.msra.mxu0 0
    %199 = vmatprep.subr.bf16.mxu0 0
    %200 = vmatpush1.bf16.msra.mxu0 0
    %201 = vmatprep.subr.bf16.mxu0 0
    %202 = vmatpush1.bf16.msra.mxu0 0
    %203 = vmatprep.subr.bf16.mxu0 0
    %204 = vmatpush1.bf16.msra.mxu0 0
    %205 = vmatprep.subr.bf16.mxu0 0
    %206 = vmatpush1.bf16.msra.mxu0 0
    %207 = vmatprep.subr.bf16.mxu0 0
    %208 = vmatpush1.bf16.msra.mxu0 0
    %209 = vmatprep.subr.bf16.mxu0 0
    %210 = vmatpush1.bf16.msra.mxu0 0
    %211 = vmatprep.mubr.bf16.mxu0 0
    %212 = vmatmul.mubr.bf16.gmra.mrb[0].mxu0 %v177
    %v213 = vpop.f32.mrb[0].mxu0
    %v214 = vadd.f32 %v164, %v213
    %v215 = vpop.f32.mrb[0].mxu0
    %v216 = vpop.f32.mrb[0].mxu0
    %v217 = vadd.f32 %v169, %v216
    %v218 = vpop.f32.mrb[0].mxu0
    %219 = vdwg.mxu0
    %v220 = vmax.f32 %v214, 0.0
    %v221 = vmax.f32 %v217, 0.0
    %v222 = vpack.c.bf16 %v221, %v220
    %224 = vset.pattern.permute.xlu0 0
    %225 = vperm.xlu0 %224, %v29
    %v226 = vpop.permute.xlu0 %225
    %v229 = vsel %vm113, %v22, 0
    %231 = vmatprep.subr.bf16.mxu0 0
    %232 = vmatpush1.bf16.msra.mxu0 %v222
    %233 = vmatprep.subr.bf16.mxu0 0
    %234 = vmatpush1.bf16.msra.mxu0 0
    %235 = vmatprep.subr.bf16.mxu0 0
    %236 = vmatpush1.bf16.msra.mxu0 0
    %237 = vmatprep.subr.bf16.mxu0 0
    %238 = vmatpush1.bf16.msra.mxu0 0
    %239 = vmatprep.subr.bf16.mxu0 0
    %240 = vmatpush1.bf16.msra.mxu0 0
    %241 = vmatprep.subr.bf16.mxu0 0
    %242 = vmatpush1.bf16.msra.mxu0 0
    %243 = vmatprep.subr.bf16.mxu0 0
    %244 = vmatpush1.bf16.msra.mxu0 0
    %245 = vmatprep.subr.bf16.mxu0 0
    %246 = vmatpush1.bf16.msra.mxu0 0
    %247 = vmatprep.subr.bf16.mxu0 0
    %248 = vmatpush1.bf16.msra.mxu0 0
    %249 = vmatprep.subr.bf16.mxu0 0
    %250 = vmatpush1.bf16.msra.mxu0 0
    %251 = vmatprep.subr.bf16.mxu0 0
    %252 = vmatpush1.bf16.msra.mxu0 0
    %253 = vmatprep.subr.bf16.mxu0 0
    %254 = vmatpush1.bf16.msra.mxu0 0
    %255 = vmatprep.subr.bf16.mxu0 0
    %256 = vmatpush1.bf16.msra.mxu0 0
    %257 = vmatprep.subr.bf16.mxu0 0
    %258 = vmatpush1.bf16.msra.mxu0 0
    %259 = vmatprep.subr.bf16.mxu0 0
    %260 = vmatpush1.bf16.msra.mxu0 0
    %261 = vmatprep.subr.bf16.mxu0 0
    %262 = vmatpush1.bf16.msra.mxu0 0
    %263 = vmatprep.mubr.bf16.mxu0 0
    %264 = vmatmul.mubr.bf16.gmra.mrb[0].mxu0 %v229
    %v265 = vpop.f32.mrb[0].mxu0
    %v266 = vadd.f32 %v226, %v265
    %v267 = vpop.f32.mrb[0].mxu0
    %v268 = vpop.f32.mrb[0].mxu0
    %v269 = vpop.f32.mrb[0].mxu0
    %270 = vdwg.mxu0
    %271 = vst [vmem:[#allocation2] sm:$0xff] %v266
    // Predicated region
    $region14: #{tpu_custom_call.1} parent=1 // pred_check
      _
    $region15: #{tpu_custom_call.1} parent=1 // pred_check_branch
      %273 = sbr.rel (0) target = $region17
    $region16: #{tpu_custom_call.1} parent=1 // pred_region
      %s275 = ssub.s32 128, 128
      %276 = vsyncadd [#allocation3], %s275
      %s278 = sshll.u32 [#allocation2], 4
      %s279 = int_to_ptr.vmem [resolvable:$true] %s278
      %281 = dma.vmem_to_hbm [thread:$0]  %s279, 128, %s3, [#allocation3]
    $region17: #{tpu_custom_call.1} parent=1 // pred_fallthru
      _
    // Predicated region
    $region18: #{tpu_custom_call.1} parent=1 // pred_check
      _
    $region19: #{tpu_custom_call.1} parent=1 // pred_check_branch
      %283 = sbr.rel (0) target = $region21
    $region20: #{tpu_custom_call.1} parent=1 // pred_region
      %284 = dma.done [#allocation3], 128
    $region21: #{tpu_custom_call.1} parent=1 // pred_fallthru
      _
    %285 = vsyncpa [#allocation3], 1

</llo_original>
